<compile_context>
chip_gen: v7x
topology: tpu7x:2x2x1
jax: 0.10.0
libtpu: 0.0.40
codegen_flags: <defaults>
</compile_context>

<pallas_src>
import functools
import math

import jax
import jax.numpy as jnp
from jax import lax
from jax.experimental import pallas as pl
from jax.experimental.pallas import tpu as pltpu


# ----------------------------------------------------------------------------
# Generation-aware VMEM limit
# ----------------------------------------------------------------------------
@functools.lru_cache(maxsize=None)
def _vmem_limit_bytes():
    cap = 128 * 1024 * 1024  # v5e/v6e physical VMEM (fallback)
    try:
        cap = int(pltpu.get_tpu_info().vmem_capacity_bytes)
    except Exception:
        pass
    # Leave ~25% headroom for compiler-internal scratch, cap at 100 MiB.
    # v7x (64 MiB physical) -> ~48 MiB; v5e/v6e (128 MiB) -> 96 MiB.
    return max(32 * 1024 * 1024, min(cap * 3 // 4, 100 * 1024 * 1024))


# ----------------------------------------------------------------------------
# Kernels
# ----------------------------------------------------------------------------
def qkv_linear_kernel(x_ref, w_ref, b_ref, q_ref, k_ref, v_ref):
    # x: [tm, Din] (activations), w: [1, D, Din] bf16, b: [1, 1, D] f32.
    # grid axis 1 (j) selects which projection's weight slab is resident.
    j = pl.program_id(1)
    y = lax.dot_general(
        x_ref[...].astype(jnp.bfloat16), w_ref[0],
        dimension_numbers=(((1,), (1,)), ((), ())),   # contract minor dims, no .T
        preferred_element_type=jnp.float32,
    ) + b_ref[0].astype(jnp.float32)

    @pl.when(j == 0)
    def _():
        q_ref[...] = y.astype(q_ref.dtype)

    @pl.when(j == 1)
    def _():
        k_ref[...] = y.astype(k_ref.dtype)

    @pl.when(j == 2)
    def _():
        v_ref[...] = y.astype(v_ref.dtype)


def linear_kernel(x_ref, w_ref, b_ref, o_ref):
    # x: [tm, Din], w: [tn, Din] (bf16), b: [1, tn] -> o: [tm, tn]
    y = lax.dot_general(
        x_ref[...].astype(jnp.bfloat16), w_ref[...].astype(jnp.bfloat16),
        dimension_numbers=(((1,), (1,)), ((), ())),
        preferred_element_type=jnp.float32,
    ) + b_ref[...].astype(jnp.float32)
    o_ref[...] = y.astype(o_ref.dtype)


def flash_attention_kernel(q_ref, k_ref, v_ref, o_ref, m_ref, l_ref, acc_ref,
                           *, h, d_k, kv_len):
    # q_ref: [1, tq, D] bf16 (already scaled via Wq), k_ref/v_ref: [1, tk, D]
    # o_ref: [1, tq, D]; scratch m/l: [h, tq, 1] f32, acc: [h, tq, d_k] f32.
    ki = pl.program_id(2)
    tk = k_ref.shape[1]

    @pl.when(ki == 0)
    def _init():
        m_ref[...] = jnp.full(m_ref.shape, -jnp.inf, dtype=m_ref.dtype)
        l_ref[...] = jnp.zeros(l_ref.shape, dtype=l_ref.dtype)
        acc_ref[...] = jnp.zeros(acc_ref.shape, dtype=acc_ref.dtype)

    q = q_ref[0]
    k = k_ref[0]
    v = v_ref[0]

    # Static: only emit masking code when tk does not divide the KV length.
    k_tail = (kv_len % tk) != 0
    if k_tail:
        col_ok = (ki * tk + lax.broadcasted_iota(jnp.int32, (1, tk), 1)) < kv_len
        row_ok = (ki * tk + lax.broadcasted_iota(jnp.int32, (tk, 1), 0)) < kv_len
        v = jnp.where(row_ok, v, jnp.zeros_like(v))   # keep garbage out of PV

    for head in range(h):
        sl = slice(head * d_k, (head + 1) * d_k)
        q_h = q[:, sl].astype(jnp.bfloat16)            # [tq, d_k]
        k_h = k[:, sl].astype(jnp.bfloat16)            # [tk, d_k]
        v_h = v[:, sl].astype(jnp.bfloat16)            # [tk, d_k]

        # scores = q_h @ k_h^T (bf16 operands, f32 accumulation), no explicit .T.
        s = lax.dot_general(
            q_h, k_h,
            dimension_numbers=(((1,), (1,)), ((), ())),
            preferred_element_type=jnp.float32,
        )                                              # [tq, tk] f32
        if k_tail:
            s = jnp.where(col_ok, s, -jnp.inf)

        m_prev = m_ref[head]                                       # [tq, 1]
        m_new = jnp.maximum(m_prev, jnp.max(s, axis=-1, keepdims=True))
        alpha = jnp.exp(m_prev - m_new)
        p = jnp.exp(s - m_new)                                     # [tq, tk] f32
        l_ref[head] = alpha * l_ref[head] + jnp.sum(p, axis=-1, keepdims=True)
        acc_ref[head] = alpha * acc_ref[head] + lax.dot_general(
            p.astype(jnp.bfloat16), v_h,
            dimension_numbers=(((1,), (0,)), ((), ())),
            preferred_element_type=jnp.float32,
        )
        m_ref[head] = m_new

    @pl.when(ki == pl.num_programs(2) - 1)
    def _finalize():
        pieces = []
        for head in range(h):
            inv_l = 1.0 / l_ref[head]        # exact; once per q-tile, negligible
            pieces.append(acc_ref[head] * inv_l)
        # Single lane-dense store of width D (= h * d_k).
        o_ref[0] = jnp.concatenate(pieces, axis=-1).astype(o_ref.dtype)


# ----------------------------------------------------------------------------
# Wrappers around pallas_call
# ----------------------------------------------------------------------------
def pallas_qkv_linear(x2d, w_qkv, b_qkv, *, tm=512):
    """x2d: [N, Din]; w_qkv: [3, D, Din] bf16; b_qkv: [3, 1, D] f32 -> 3x [N, D] bf16."""
    n, d_in = x2d.shape
    _, d, _ = w_qkv.shape
    tm = min(tm, n)
    n_rows = pl.cdiv(n, tm)
    out_sd = jax.ShapeDtypeStruct((n, d), jnp.bfloat16)
    cost = pl.CostEstimate(
        flops=int(2 * n * d_in * 3 * d),
        transcendentals=0,
        bytes_accessed=int(n * d_in * jnp.dtype(x2d.dtype).itemsize
                           + n_rows * 3 * d * d_in * 2      # weight slabs re-streamed
                           + 3 * n * d * 2),
    )
    return pl.pallas_call(
        qkv_linear_kernel,
        out_shape=(out_sd, out_sd, out_sd),
        grid=(n_rows, 3),
        in_specs=[
            pl.BlockSpec((tm, d_in), lambda i, j: (i, 0)),       # x resident across j
            pl.BlockSpec((1, d, d_in), lambda i, j: (j, 0, 0)),  # one weight slab / step
            pl.BlockSpec((1, 1, d), lambda i, j: (j, 0, 0)),
        ],
        out_specs=(
            pl.BlockSpec((tm, d), lambda i, j: (i, 0)),
            pl.BlockSpec((tm, d), lambda i, j: (i, 0)),
            pl.BlockSpec((tm, d), lambda i, j: (i, 0)),
        ),
        compiler_params=pltpu.CompilerParams(
            dimension_semantics=("parallel", "arbitrary"),
            vmem_limit_bytes=_vmem_limit_bytes(),
        ),
        cost_estimate=cost,
    )(x2d, w_qkv, b_qkv)


def pallas_linear(x2d, w, b, *, out_dtype=None, tm=512, tn=512):
    """x2d: [N, Din], w: [Dout, Din] (bf16), b: [Dout] -> [N, Dout]."""
    n, d_in = x2d.shape
    d_out = w.shape[0]
    out_dtype = x2d.dtype if out_dtype is None else out_dtype
    tm = min(tm, n)
    tn = min(tn, d_out)
    n_rows, n_cols = pl.cdiv(n, tm), pl.cdiv(d_out, tn)
    cost = pl.CostEstimate(
        flops=int(2 * n * d_in * d_out),
        transcendentals=0,
        bytes_accessed=int(n * d_in * jnp.dtype(x2d.dtype).itemsize
                           + n_rows * d_out * d_in * jnp.dtype(w.dtype).itemsize
                           + n * d_out * jnp.dtype(out_dtype).itemsize),
    )
    return pl.pallas_call(
        linear_kernel,
        out_shape=jax.ShapeDtypeStruct((n, d_out), out_dtype),
        grid=(n_rows, n_cols),
        in_specs=[
            pl.BlockSpec((tm, d_in), lambda i, j: (i, 0)),
            pl.BlockSpec((tn, d_in), lambda i, j: (j, 0)),   # Dout tiled (v7x VMEM)
            pl.BlockSpec((1, tn), lambda i, j: (0, j)),
        ],
        out_specs=pl.BlockSpec((tm, tn), lambda i, j: (i, j)),
        compiler_params=pltpu.CompilerParams(
            dimension_semantics=("parallel", "parallel"),
            vmem_limit_bytes=_vmem_limit_bytes(),
        ),
        cost_estimate=cost,
    )(x2d, w, b.reshape(1, d_out))


def pallas_flash_attention(q, k, v, *, h, tq=512, tk=128):
    """q: [B, Sq, D], k/v: [B, Sk, D] (heads packed along D) -> [B, Sq, D]."""
    B, Sq, D = q.shape
    Sk = k.shape[1]
    d_k = D // h
    tq = min(tq, Sq)
    tk = min(tk, Sk)
    n_q, n_k = pl.cdiv(Sq, tq), pl.cdiv(Sk, tk)
    itemsize = jnp.dtype(q.dtype).itemsize

    kernel = functools.partial(flash_attention_kernel, h=h, d_k=d_k, kv_len=Sk)
    cost = pl.CostEstimate(
        flops=int(4 * B * Sq * Sk * D),                 # QK^T + PV over all heads
        transcendentals=int(B * h * Sq * Sk),           # exp
        bytes_accessed=int(itemsize * (B * Sq * D       # Q read once
                                       + 2 * n_q * B * Sk * D   # K, V per q-tile
                                       + B * Sq * D)),  # O written once
    )

    # NOTE: if profiling shows exposed DMA on the K/V stream, add
    # pipeline_mode=pl.Buffered(3) to the k/v BlockSpecs below.
    return pl.pallas_call(
        kernel,
        out_shape=jax.ShapeDtypeStruct((B, Sq, D), q.dtype),
        grid=(B, n_q, n_k),
        in_specs=[
            pl.BlockSpec((1, tq, D), lambda b, qi, ki: (b, qi, 0)),
            pl.BlockSpec((1, tk, D), lambda b, qi, ki: (b, ki, 0)),
            pl.BlockSpec((1, tk, D), lambda b, qi, ki: (b, ki, 0)),
        ],
        out_specs=pl.BlockSpec((1, tq, D), lambda b, qi, ki: (b, qi, 0)),
        scratch_shapes=[
            pltpu.VMEM((h, tq, 1), jnp.float32),     # m (running max)
            pltpu.VMEM((h, tq, 1), jnp.float32),     # l (running denom)
            pltpu.VMEM((h, tq, d_k), jnp.float32),   # acc (running context)
        ],
        compiler_params=pltpu.CompilerParams(
            dimension_semantics=("parallel", "parallel", "arbitrary"),
            vmem_limit_bytes=_vmem_limit_bytes(),
        ),
        cost_estimate=cost,
    )(q, k, v)


def multi_headed_attention(query, key, value, params, h):
    """query: [B, Sq, d_model], key/value: [B, Sk, d_model] -> [B, Sq, d_model]."""
    B, S, D = query.shape
    d_k = D // h
    scale = 1.0 / math.sqrt(d_k)

    # Fold the softmax scale into the Q projection; store weights in bf16.
    wq = (params["wq"] * scale).astype(jnp.bfloat16)
    bq = (params["bq"] * scale).astype(jnp.float32)
    wk = params["wk"].astype(jnp.bfloat16)
    wv = params["wv"].astype(jnp.bfloat16)

    if key is query and value is query:
        # Self-attention: fused QKV projection, x read once.
        w_qkv = jnp.stack([wq, wk, wv], axis=0)                       # [3, D, D] bf16
        b_qkv = jnp.stack([bq, params["bk"], params["bv"]], axis=0).reshape(3, 1, D)
        q2d, k2d, v2d = pallas_qkv_linear(query.reshape(B * S, D), w_qkv, b_qkv)
        Sk = S
    else:
        # General (cross-attention) path: three separate projections.
        Sk = key.shape[1]
        q2d = pallas_linear(query.reshape(-1, D), wq, bq, out_dtype=jnp.bfloat16)
        k2d = pallas_linear(key.reshape(-1, D), wk, params["bk"], out_dtype=jnp.bfloat16)
        v2d = pallas_linear(value.reshape(-1, D), wv, params["bv"], out_dtype=jnp.bfloat16)

    q = q2d.reshape(B, S, D)
    k = k2d.reshape(B, Sk, D)
    v = v2d.reshape(B, Sk, D)

    ctx = pallas_flash_attention(q, k, v, h=h)          # [B, S, D] bf16, heads packed
    out = pallas_linear(ctx.reshape(B * S, D), params["wo"].astype(jnp.bfloat16),
                        params["bo"], out_dtype=query.dtype)
    return out.reshape(B, S, D)


# ----------------------------------------------------------------------------
# Reference (plain JAX, f32) for sanity checking
# ----------------------------------------------------------------------------
def reference_mha(query, key, value, params, h):
    B, S, D = query.shape
    d_k = D // h

    def lin(x, w, b):
        return x @ w.T + b

    def proj(x, w, b):
        return lin(x, w, b).reshape(B, -1, h, d_k).transpose(0, 2, 1, 3)

    q = proj(query, params["wq"], params["bq"])
    k = proj(key, params["wk"], params["bk"])
    v = proj(value, params["wv"], params["bv"])
    scores = jnp.einsum("bhqd,bhkd->bhqk", q, k) / math.sqrt(d_k)
    p = jax.nn.softmax(scores, axis=-1)
    x = jnp.einsum("bhqk,bhkd->bhqd", p, v)
    x = x.transpose(0, 2, 1, 3).reshape(B, S, D)
    return lin(x, params["wo"], params["bo"])


# ----------------------------------------------------------------------------
# Main
# ----------------------------------------------------------------------------
if __name__ == "__main__":
    B, S, d_model, h = 2, 8, 32, 4

    key0 = jax.random.PRNGKey(0)
    keys = jax.random.split(key0, 12)

    bound = 1.0 / math.sqrt(d_model)

    def init_w(k):
        return jax.random.uniform(
            k, (d_model, d_model), jnp.float32, minval=-bound, maxval=bound
        )

    def init_b(k):
        return jax.random.uniform(
            k, (d_model,), jnp.float32, minval=-bound, maxval=bound
        )

    params = {
        "wq": init_w(keys[0]), "bq": init_b(keys[1]),
        "wk": init_w(keys[2]), "bk": init_b(keys[3]),
        "wv": init_w(keys[4]), "bv": init_b(keys[5]),
        "wo": init_w(keys[6]), "bo": init_b(keys[7]),
    }

    query = jax.random.normal(keys[8], (B, S, d_model), jnp.float32)

    # Self-attention usage (query = key = value), as in the standard encoder.
    out = multi_headed_attention(query, query, query, params, h)
    out = jax.block_until_ready(out)

    ref = reference_mha(query, query, query, params, h)
    assert out.shape == (B, S, d_model)
    # Tolerance accounts for bf16 MXU operands / bf16 q,k,v,context intermediates
    # (the f32 reference is exact); real bugs produce errors far above this.
    assert jnp.allclose(out, ref, atol=5e-2, rtol=5e-2), float(
        jnp.max(jnp.abs(out - ref))
    )

    print("KERNEL_OK")
</pallas_src>

<mosaic_0001>
module attributes {stable_mosaic.version = 11 : i64} {
  func.func @qkv_linear_kernel(%arg0: i32, %arg1: i32, %arg2: memref<16x32xf32, #tpu.memory_space<vmem>>, %arg3: memref<1x32x32xbf16, #tpu.memory_space<vmem>>, %arg4: memref<1x1x32xf32, #tpu.memory_space<vmem>>, %arg5: memref<16x32xbf16, #tpu.memory_space<vmem>>, %arg6: memref<16x32xbf16, #tpu.memory_space<vmem>>, %arg7: memref<16x32xbf16, #tpu.memory_space<vmem>>) attributes {dimension_semantics = [#tpu.dimension_semantics<parallel>, #tpu.dimension_semantics<arbitrary>], iteration_bounds = array<i64: 1, 3>, scalar_prefetch = 0 : i64, scratch_operands = 0 : i64, tpu.core_type = #tpu.core_type<tc>, window_params = [{transform_indices = @transform_0, window_bounds = array<i64: 16, 32>}, {transform_indices = @transform_1, window_bounds = array<i64: 1, 32, 32>}, {transform_indices = @transform_2, window_bounds = array<i64: 1, 1, 32>}, {transform_indices = @transform_3, window_bounds = array<i64: 16, 32>}, {transform_indices = @transform_4, window_bounds = array<i64: 16, 32>}, {transform_indices = @transform_5, window_bounds = array<i64: 16, 32>}]} {
    %c0 = arith.constant 0 : index
    %c0_0 = arith.constant 0 : index
    %0 = vector.load %arg2[%c0, %c0_0] : memref<16x32xf32, #tpu.memory_space<vmem>>, vector<16x32xf32>
    %1 = arith.truncf %0 : vector<16x32xf32> to vector<16x32xbf16>
    %c0_1 = arith.constant 0 : index
    %c0_2 = arith.constant 0 : index
    %c0_3 = arith.constant 0 : index
    %2 = vector.load %arg3[%c0_1, %c0_2, %c0_3] : memref<1x32x32xbf16, #tpu.memory_space<vmem>>, vector<1x32x32xbf16>
    %3 = vector.shape_cast %2 : vector<1x32x32xbf16> to vector<32x32xbf16>
    %cst = arith.constant dense<0.000000e+00> : vector<16x32xf32>
    %4 = tpu.matmul %1, %3, %cst {dimension_numbers = #tpu.dot_dimension_numbers<[1], [1], [0], [0], [0, 0, 1, 0], [], []>} : vector<16x32xbf16>, vector<32x32xbf16>, vector<16x32xf32> -> vector<16x32xf32>
    %c0_4 = arith.constant 0 : index
    %c0_5 = arith.constant 0 : index
    %c0_6 = arith.constant 0 : index
    %5 = vector.load %arg4[%c0_4, %c0_5, %c0_6] : memref<1x1x32xf32, #tpu.memory_space<vmem>>, vector<1x1x32xf32>
    %6 = vector.shape_cast %5 : vector<1x1x32xf32> to vector<1x32xf32>
    %7 = vector.broadcast %6 : vector<1x32xf32> to vector<16x32xf32>
    %8 = arith.addf %4, %7 : vector<16x32xf32>
    %c0_i32 = arith.constant 0 : i32
    %9 = arith.cmpi eq, %arg1, %c0_i32 : i32
    %10 = arith.extui %9 : i1 to i32
    %c0_i32_7 = arith.constant 0 : i32
    %11 = arith.cmpi ne, %10, %c0_i32_7 : i32
    scf.if %11 {
      %18 = arith.truncf %8 : vector<16x32xf32> to vector<16x32xbf16>
      %c0_10 = arith.constant 0 : index
      %c0_11 = arith.constant 0 : index
      %19 = vector.load %arg5[%c0_10, %c0_11] : memref<16x32xbf16, #tpu.memory_space<vmem>>, vector<16x32xbf16>
      tpu.vector_store %arg5[%c0_10, %c0_11], %18 {strides = array<i32>} : memref<16x32xbf16, #tpu.memory_space<vmem>>, vector<16x32xbf16>,
    } else {
    }
    %c1_i32 = arith.constant 1 : i32
    %12 = arith.cmpi eq, %arg1, %c1_i32 : i32
    %13 = arith.extui %12 : i1 to i32
    %c0_i32_8 = arith.constant 0 : i32
    %14 = arith.cmpi ne, %13, %c0_i32_8 : i32
    scf.if %14 {
      %18 = arith.truncf %8 : vector<16x32xf32> to vector<16x32xbf16>
      %c0_10 = arith.constant 0 : index
      %c0_11 = arith.constant 0 : index
      %19 = vector.load %arg6[%c0_10, %c0_11] : memref<16x32xbf16, #tpu.memory_space<vmem>>, vector<16x32xbf16>
      tpu.vector_store %arg6[%c0_10, %c0_11], %18 {strides = array<i32>} : memref<16x32xbf16, #tpu.memory_space<vmem>>, vector<16x32xbf16>,
    } else {
    }
    %c2_i32 = arith.constant 2 : i32
    %15 = arith.cmpi eq, %arg1, %c2_i32 : i32
    %16 = arith.extui %15 : i1 to i32
    %c0_i32_9 = arith.constant 0 : i32
    %17 = arith.cmpi ne, %16, %c0_i32_9 : i32
    scf.if %17 {
      %18 = arith.truncf %8 : vector<16x32xf32> to vector<16x32xbf16>
      %c0_10 = arith.constant 0 : index
      %c0_11 = arith.constant 0 : index
      %19 = vector.load %arg7[%c0_10, %c0_11] : memref<16x32xbf16, #tpu.memory_space<vmem>>, vector<16x32xbf16>
      tpu.vector_store %arg7[%c0_10, %c0_11], %18 {strides = array<i32>} : memref<16x32xbf16, #tpu.memory_space<vmem>>, vector<16x32xbf16>,
    } else {
    }
    return
  }
  func.func @transform_0(%arg0: i32, %arg1: i32) -> (i32, i32) {
    %c0_i32 = arith.constant 0 : i32
    %c0_i32_0 = arith.constant 0 : i32
    return %arg0, %c0_i32 : i32, i32
  }
  func.func @transform_1(%arg0: i32, %arg1: i32) -> (i32, i32, i32) {
    %c0_i32 = arith.constant 0 : i32
    %c0_i32_0 = arith.constant 0 : i32
    %c0_i32_1 = arith.constant 0 : i32
    return %arg1, %c0_i32, %c0_i32_0 : i32, i32, i32
  }
  func.func @transform_2(%arg0: i32, %arg1: i32) -> (i32, i32, i32) {
    %c0_i32 = arith.constant 0 : i32
    %c0_i32_0 = arith.constant 0 : i32
    %c0_i32_1 = arith.constant 0 : i32
    return %arg1, %c0_i32, %c0_i32_0 : i32, i32, i32
  }
  func.func @transform_3(%arg0: i32, %arg1: i32) -> (i32, i32) {
    %c0_i32 = arith.constant 0 : i32
    %c0_i32_0 = arith.constant 0 : i32
    return %arg0, %c0_i32 : i32, i32
  }
  func.func @transform_4(%arg0: i32, %arg1: i32) -> (i32, i32) {
    %c0_i32 = arith.constant 0 : i32
    %c0_i32_0 = arith.constant 0 : i32
    return %arg0, %c0_i32 : i32, i32
  }
  func.func @transform_5(%arg0: i32, %arg1: i32) -> (i32, i32) {
    %c0_i32 = arith.constant 0 : i32
    %c0_i32_0 = arith.constant 0 : i32
    return %arg0, %c0_i32 : i32, i32
  }
}

</mosaic_0001>

<llo_original>
// kernel: tpu_custom_call.1
$region0: #{tpu_custom_call.1}
  #allocation0 [shape = 'u32[]', space=smem, size = 0x4, offset = 0x4, fixed_abs, tag = 'smem constant byte address 0x4 - core index']
  #allocation1 [shape = 'u32[144,128]{1,0:T(1,128)}', space=vmem, size = 0x12000, scoped, tag = 'internal scratch']
  %s0 = inlined_call_operand.hbm [shape: f32[16,32], index: 0, kind: input, shape index: {}]
  %s1 = inlined_call_operand.hbm [shape: bf16[3,32,32], index: 1, kind: input, shape index: {}]
  %s2 = inlined_call_operand.hbm [shape: f32[3,1,32], index: 2, kind: input, shape index: {}]
  %s3 = inlined_call_operand.hbm [shape: bf16[16,32], index: 3, kind: output, shape index: {0}]
  %s4 = inlined_call_operand.hbm [shape: bf16[16,32], index: 4, kind: output, shape index: {1}]
  %s5 = inlined_call_operand.hbm [shape: bf16[16,32], index: 5, kind: output, shape index: {2}]
  %6 = xla_tuple %s3, %s4, %s5
  %s7 = sld [smem:[#allocation0]]
  $region85: #{tpu_custom_call.1} parent=0
    _
  %s9 = ssub.s32 1, %s7
  %s10 = scalar_select 0, %s9, %s7
  $region1: #{tpu_custom_call.1} parent=0
    #allocation2 [shape = 'u8[8192]{0}', space=vmem, size = 0x2000, scoped, tag = 'input window, operand 0, single buffered']
    #allocation3 [shape = 's32[2]{0}', space=sflag, size = 0x8, scoped, tag = 'scoped memory for tpu_custom_call.1']
    #allocation4 [shape = 's32[2]{0}', space=sflag, size = 0x8, scoped, tag = 'scoped memory for tpu_custom_call.1']
    #allocation5 [shape = 'u8[16384]{0}', space=vmem, size = 0x4000, scoped, tag = 'input window, operand 1']
    #allocation6 [shape = 's32[2]{0}', space=sflag, size = 0x8, scoped, tag = 'scoped memory for tpu_custom_call.1']
    #allocation7 [shape = 'u8[1024]{0}', space=vmem, size = 0x400, scoped, tag = 'input window, operand 2']
    #allocation8 [shape = 'u8[4096]{0}', space=vmem, size = 0x1000, scoped, tag = 'output window, operand 0, single buffered']
    #allocation9 [shape = 'u8[4096]{0}', space=vmem, size = 0x1000, scoped, tag = 'output window, operand 1, single buffered']
    #allocation10 [shape = 's32[1]{0}', space=sflag, size = 0x4, scoped, tag = 'scoped memory for tpu_custom_call.1']
    #allocation11 [shape = 'u8[4096]{0}', space=vmem, size = 0x1000, scoped, tag = 'output window, operand 2, single buffered']
    %11 = vsyncpa [#allocation3], 0
    %12 = vsyncpa [#allocation6], 0
    %s13 = scalar_lea.sflag [#allocation6], 1
    %14 = vsyncpa %s13, 0
    %15 = vsyncpa [#allocation4], 0
    %16 = vsyncpa [#allocation10], 0
    loop: start=0, step=1, limit=5
    $region2: #{tpu_custom_call.1} parent=1 // loop_pre_header
      _
    $region3: #{tpu_custom_call.1} parent=1 // loop_header
      %s18 = sphi 0, %s22
      %p19 = scmp.ge.s32.totalorder %s18, 5
      %s25 = sphi 0, %s37
      %s26 = sphi 0, %s33
      %s27 = sphi 0, %s25
      %s28 = sphi 0, %s26
      %s29 = sphi 0, %s27
      %s30 = sphi 0, %s28
      %s40 = sphi 0, %s42
      %s43 = sphi 0, %s40
      %s44 = sphi 0, %s43
      %s60 = sphi 0, %s44
      %s66 = sphi 0, %s68
      %s69 = sphi 0, %s66
      %s70 = sphi 0, %s69
      %s86 = sphi 0, %s70
      %s92 = sphi 0, %s94
      %s95 = sphi 0, %s92
      %s96 = sphi 0, %s95
      %s112 = sphi 0, %s96
      %s118 = sphi 0, %s120
      %s121 = sphi 0, %s118
      %s122 = sphi 0, %s121
      %s138 = sphi 0, %s122
      %s144 = sphi 0, %s146
      %s147 = sphi 0, %s144
      %s148 = sphi 0, %s147
      %s164 = sphi 0, %s148
      %s170 = sphi 0, %s172
      %s173 = sphi 0, %s170
      %s174 = sphi 0, %s173
      %s190 = sphi 0, %s174
    $region4: #{tpu_custom_call.1} parent=1 // loop_header_branch
      %21 = sbr.rel (%p19) target = $region8
    $region5: #{tpu_custom_call.1} parent=1 // loop_body
      %s23 = ssub.s32 %s18, 1
      %s24 = ssub.s32 %s18, 2
      %s31 = sadd.s32 1, %s26
      %p32 = scmp.ge.s32.totalorder %s31, 3
      %s33 = scalar_select %p32, 0, %s31
      %s34 = sadd.s32 1, %s25
      %s35 = scalar_select %p32, %s34, %s25
      %p36 = scmp.ge.s32.totalorder %s35, 1
      %s37 = scalar_select %p36, 0, %s35
      %s38 = ssub.s32 %s25, %s37
      %p39 = scmp.eq.s32.totalorder %s38, 0
      %s41 = sadd.s32 %s40, 1
      %s42 = scalar_select %p39, %s40, %s41
      %p45 = pneg %p39
      %p46 = scmp.eq.s32.totalorder %s18, 2
      %p47 = por %p45, %p46
      %p48 = scmp.ne.s32.totalorder %s40, %s43
      %p49 = scmp.eq.s32.totalorder %s18, 0
      %p50 = por %p48, %p49
      %p51 = scmp.ne.s32.totalorder %s40, %s43
      %p52 = scmp.eq.s32.totalorder %s23, 2
      %p53 = por %p51, %p52
      %p54 = scmp.ne.s32.totalorder %s43, %s44
      %p55 = scmp.eq.s32.totalorder %s23, 0
      %p56 = por %p54, %p55
      %p57 = scmp.ne.s32.totalorder %s43, %s44
      %p58 = scmp.eq.s32.totalorder %s24, 2
      %p59 = por %p57, %p58
      %p61 = scmp.ne.s32.totalorder %s44, %s60
      %p62 = scmp.eq.s32.totalorder %s24, 0
      %p63 = por %p61, %p62
      %s64 = ssub.s32 %s26, %s33
      %p65 = scmp.eq.s32.totalorder %s64, 0
      %s67 = sadd.s32 %s66, 1
      %s68 = scalar_select %p65, %s66, %s67
      %p71 = pneg %p65
      %p72 = scmp.eq.s32.totalorder %s18, 2
      %p73 = por %p71, %p72
      %p74 = scmp.ne.s32.totalorder %s66, %s69
      %p75 = scmp.eq.s32.totalorder %s18, 0
      %p76 = por %p74, %p75
      %p77 = scmp.ne.s32.totalorder %s66, %s69
      %p78 = scmp.eq.s32.totalorder %s23, 2
      %p79 = por %p77, %p78
      %p80 = scmp.ne.s32.totalorder %s69, %s70
      %p81 = scmp.eq.s32.totalorder %s23, 0
      %p82 = por %p80, %p81
      %p83 = scmp.ne.s32.totalorder %s69, %s70
      %p84 = scmp.eq.s32.totalorder %s24, 2
      %p85 = por %p83, %p84
      %p87 = scmp.ne.s32.totalorder %s70, %s86
      %p88 = scmp.eq.s32.totalorder %s24, 0
      %p89 = por %p87, %p88
      %s90 = ssub.s32 %s26, %s33
      %p91 = scmp.eq.s32.totalorder %s90, 0
      %s93 = sadd.s32 %s92, 1
      %s94 = scalar_select %p91, %s92, %s93
      %p97 = pneg %p91
      %p98 = scmp.eq.s32.totalorder %s18, 2
      %p99 = por %p97, %p98
      %p100 = scmp.ne.s32.totalorder %s92, %s95
      %p101 = scmp.eq.s32.totalorder %s18, 0
      %p102 = por %p100, %p101
      %p103 = scmp.ne.s32.totalorder %s92, %s95
      %p104 = scmp.eq.s32.totalorder %s23, 2
      %p105 = por %p103, %p104
      %p106 = scmp.ne.s32.totalorder %s95, %s96
      %p107 = scmp.eq.s32.totalorder %s23, 0
      %p108 = por %p106, %p107
      %p109 = scmp.ne.s32.totalorder %s95, %s96
      %p110 = scmp.eq.s32.totalorder %s24, 2
      %p111 = por %p109, %p110
      %p113 = scmp.ne.s32.totalorder %s96, %s112
      %p114 = scmp.eq.s32.totalorder %s24, 0
      %p115 = por %p113, %p114
      %s116 = ssub.s32 %s25, %s37
      %p117 = scmp.eq.s32.totalorder %s116, 0
      %s119 = sadd.s32 %s118, 1
      %s120 = scalar_select %p117, %s118, %s119
      %p123 = pneg %p117
      %p124 = scmp.eq.s32.totalorder %s18, 2
      %p125 = por %p123, %p124
      %p126 = scmp.ne.s32.totalorder %s118, %s121
      %p127 = scmp.eq.s32.totalorder %s18, 0
      %p128 = por %p126, %p127
      %p129 = scmp.ne.s32.totalorder %s118, %s121
      %p130 = scmp.eq.s32.totalorder %s23, 2
      %p131 = por %p129, %p130
      %p132 = scmp.ne.s32.totalorder %s121, %s122
      %p133 = scmp.eq.s32.totalorder %s23, 0
      %p134 = por %p132, %p133
      %p135 = scmp.ne.s32.totalorder %s121, %s122
      %p136 = scmp.eq.s32.totalorder %s24, 2
      %p137 = por %p135, %p136
      %p139 = scmp.ne.s32.totalorder %s122, %s138
      %p140 = scmp.eq.s32.totalorder %s24, 0
      %p141 = por %p139, %p140
      %s142 = ssub.s32 %s25, %s37
      %p143 = scmp.eq.s32.totalorder %s142, 0
      %s145 = sadd.s32 %s144, 1
      %s146 = scalar_select %p143, %s144, %s145
      %p149 = pneg %p143
      %p150 = scmp.eq.s32.totalorder %s18, 2
      %p151 = por %p149, %p150
      %p152 = scmp.ne.s32.totalorder %s144, %s147
      %p153 = scmp.eq.s32.totalorder %s18, 0
      %p154 = por %p152, %p153
      %p155 = scmp.ne.s32.totalorder %s144, %s147
      %p156 = scmp.eq.s32.totalorder %s23, 2
      %p157 = por %p155, %p156
      %p158 = scmp.ne.s32.totalorder %s147, %s148
      %p159 = scmp.eq.s32.totalorder %s23, 0
      %p160 = por %p158, %p159
      %p161 = scmp.ne.s32.totalorder %s147, %s148
      %p162 = scmp.eq.s32.totalorder %s24, 2
      %p163 = por %p161, %p162
      %p165 = scmp.ne.s32.totalorder %s148, %s164
      %p166 = scmp.eq.s32.totalorder %s24, 0
      %p167 = por %p165, %p166
      %s168 = ssub.s32 %s25, %s37
      %p169 = scmp.eq.s32.totalorder %s168, 0
      %s171 = sadd.s32 %s170, 1
      %s172 = scalar_select %p169, %s170, %s171
      %p175 = pneg %p169
      %p176 = scmp.eq.s32.totalorder %s18, 2
      %p177 = por %p175, %p176
      %p178 = scmp.ne.s32.totalorder %s170, %s173
      %p179 = scmp.eq.s32.totalorder %s18, 0
      %p180 = por %p178, %p179
      %p181 = scmp.ne.s32.totalorder %s170, %s173
      %p182 = scmp.eq.s32.totalorder %s23, 2
      %p183 = por %p181, %p182
      %p184 = scmp.ne.s32.totalorder %s173, %s174
      %p185 = scmp.eq.s32.totalorder %s23, 0
      %p186 = por %p184, %p185
      %p187 = scmp.ne.s32.totalorder %s173, %s174
      %p188 = scmp.eq.s32.totalorder %s24, 2
      %p189 = por %p187, %p188
      %p191 = scmp.ne.s32.totalorder %s174, %s190
      %p192 = scmp.eq.s32.totalorder %s24, 0
      %p193 = por %p191, %p192
      %p194 = scmp.le.s32.totalorder 1, %s18
      %p195 = scmp.lt.s32.totalorder %s18, 4
      %p196 = pnand %p194, %p195
      %p197 = pneg %p196
      // Predicated region
      $region9: #{tpu_custom_call.1} parent=5 // pred_check
        _
      $region10: #{tpu_custom_call.1} parent=5 // pred_check_branch
        %199 = sbr.rel (%p196) target = $region12
      $region11: #{tpu_custom_call.1} parent=5 // pred_region
        %s200 = ssub.s32 %s18, 1
        // Predicated region
        $region13: #{tpu_custom_call.1} parent=11 // pred_check
          %p201 = pneg %p56
        $region14: #{tpu_custom_call.1} parent=11 // pred_check_branch
          %203 = sbr.rel (%p201) target = $region16
        $region15: #{tpu_custom_call.1} parent=11 // pred_region
          %s204 = smul.u32 2, %s27
          %s206 = ssub.s32 256, 256
          %207 = vsyncadd [#allocation3], %s206
          %s208 = smul.addr %s204, 128
          %s209 = scalar_lea.hbm %s0, %s208
          %s210 = sshll.u32 [#allocation2], 4
          %s211 = int_to_ptr.vmem [resolvable:$true] %s210
          %216 = dma.hbm_to_vmem [thread:$0]  %s209, 256, %s211, [#allocation3], 128, 128, 8
        $region16: #{tpu_custom_call.1} parent=11 // pred_fallthru
          _
      $region12: #{tpu_custom_call.1} parent=5 // pred_fallthru
        _
      %p217 = scmp.lt.s32.totalorder %s18, 3
      // Predicated region
      $region17: #{tpu_custom_call.1} parent=5 // pred_check
        %p218 = pneg %p217
      $region18: #{tpu_custom_call.1} parent=5 // pred_check_branch
        %220 = sbr.rel (%p218) target = $region20
      $region19: #{tpu_custom_call.1} parent=5 // pred_region
        // Predicated region
        $region21: #{tpu_custom_call.1} parent=19 // pred_check
          %p221 = pneg %p76
        $region22: #{tpu_custom_call.1} parent=19 // pred_check_branch
          %223 = sbr.rel (%p221) target = $region24
        $region23: #{tpu_custom_call.1} parent=19 // pred_region
          %s224 = sand.u32 %s18, 1
          %s225 = scalar_lea.sflag [#allocation6], %s224
          %s226 = sand.u32 %s66, 1
          %s227 = smul.addr %s226, 16
          %s228 = scalar_lea.vmem [#allocation5], %s227
          %s230 = ssub.s32 256, 256
          %231 = vsyncadd %s225, %s230
          %s232 = smul.addr %s26, 4
          %s233 = smul.addr %s232, 64
          %s234 = scalar_lea.hbm %s1, %s233
          %s235 = sshll.u32 %s228, 4
          %s236 = int_to_ptr.vmem [resolvable:$true] %s235
          %241 = dma.hbm_to_vmem [thread:$0]  %s234, 256, %s236, %s225, 64, 64, 4
        $region24: #{tpu_custom_call.1} parent=19 // pred_fallthru
          _
        // Predicated region
        $region25: #{tpu_custom_call.1} parent=19 // pred_check
          %p242 = pneg %p102
        $region26: #{tpu_custom_call.1} parent=19 // pred_check_branch
          %244 = sbr.rel (%p242) target = $region28
        $region27: #{tpu_custom_call.1} parent=19 // pred_region
          %s245 = sand.u32 %s18, 1
          %s246 = scalar_lea.sflag [#allocation6], %s245
          %s247 = sand.u32 %s92, 1
          %s248 = scalar_lea.vmem [#allocation7], %s247
          %s250 = ssub.s32 16, 16
          %251 = vsyncadd %s246, %s250
          %s252 = smul.addr %s26, 16
          %s253 = scalar_lea.hbm %s2, %s252
          %s255 = sshll.u32 %s248, 4
          %s256 = int_to_ptr.vmem [resolvable:$true] %s255
          %258 = dma.hbm_to_vmem [thread:$0]  %s253, 16, %s256, %s246
        $region28: #{tpu_custom_call.1} parent=19 // pred_fallthru
          _
      $region20: #{tpu_custom_call.1} parent=5 // pred_fallthru
        _
      %p259 = scmp.le.s32.totalorder 1, %s18
      %p260 = scmp.lt.s32.totalorder %s18, 4
      %p261 = pnand %p259, %p260
      %p262 = pneg %p261
      // Predicated region
      $region29: #{tpu_custom_call.1} parent=5 // pred_check
        _
      $region30: #{tpu_custom_call.1} parent=5 // pred_check_branch
        %264 = sbr.rel (%p261) target = $region32
      $region31: #{tpu_custom_call.1} parent=5 // pred_region
        %s265 = ssub.s32 %s18, 1
        // Predicated region
        $region33: #{tpu_custom_call.1} parent=31 // pred_check
          %p266 = pneg %p56
        $region34: #{tpu_custom_call.1} parent=31 // pred_check_branch
          %268 = sbr.rel (%p266) target = $region36
        $region35: #{tpu_custom_call.1} parent=31 // pred_region
          %269 = dma.done [#allocation3], 256
        $region36: #{tpu_custom_call.1} parent=31 // pred_fallthru
          _
        %s270 = sand.u32 %s23, 1
        %s271 = scalar_lea.sflag [#allocation6], %s270
        %s272 = sand.u32 %s69, 1
        %s273 = smul.addr %s272, 16
        %s274 = scalar_lea.vmem [#allocation5], %s273
        // Predicated region
        $region37: #{tpu_custom_call.1} parent=31 // pred_check
          %p275 = pneg %p82
        $region38: #{tpu_custom_call.1} parent=31 // pred_check_branch
          %277 = sbr.rel (%p275) target = $region40
        $region39: #{tpu_custom_call.1} parent=31 // pred_region
          %278 = dma.done %s271, 256
        $region40: #{tpu_custom_call.1} parent=31 // pred_fallthru
          _
        %s279 = sand.u32 %s23, 1
        %s280 = scalar_lea.sflag [#allocation6], %s279
        %s281 = sand.u32 %s95, 1
        %s282 = scalar_lea.vmem [#allocation7], %s281
        // Predicated region
        $region41: #{tpu_custom_call.1} parent=31 // pred_check
          %p283 = pneg %p108
        $region42: #{tpu_custom_call.1} parent=31 // pred_check_branch
          %285 = sbr.rel (%p283) target = $region44
        $region43: #{tpu_custom_call.1} parent=31 // pred_region
          %286 = dma.done %s280, 16
        $region44: #{tpu_custom_call.1} parent=31 // pred_fallthru
          _
        %p287 = pneg %p56
        %p288 = pneg %p53
        %s289 = sand.u32 %s23, 1
        %s290 = scalar_lea.sflag [#allocation6], %s289
        %s291 = sand.u32 %s69, 1
        %s292 = smul.addr %s291, 16
        %s293 = scalar_lea.vmem [#allocation5], %s292
        %p294 = pneg %p82
        %p295 = pneg %p79
        %s296 = sand.u32 %s23, 1
        %s297 = scalar_lea.sflag [#allocation6], %s296
        %s298 = sand.u32 %s95, 1
        %s299 = scalar_lea.vmem [#allocation7], %s298
        %p300 = pneg %p108
        %p301 = pneg %p105
        %p302 = pneg %p134
        %p303 = pneg %p131
        %p304 = pneg %p160
        %p305 = pneg %p157
        %p306 = pneg %p186
        %p307 = pneg %p183
        %s308 = smul.u32 2, %s27
        %s309 = smul.u32 2, %s27
        %s310 = smul.u32 2, %s27
        %s311 = smul.u32 2, %s27
        %v313 = vld [vmem:[#allocation2] sm:$0xff]
        %v314 = vld [vmem:[#allocation2 + $0x8] sm:$0xff]
        %v315 = vpack.c.bf16 %v314, %v313
        %v316 = vld [vmem:[%s274] sm:$0xf]
        %v317 = vld [vmem:[%s274 + $0x4] sm:$0xf]
        %v318 = vld [vmem:[%s274 + $0x8] sm:$0xf]
        %v319 = vld [vmem:[%s274 + $0xc] sm:$0xf]
        %v320 = vld [vmem:[%s282] sm:$0x1]
        %v322 = vlaneseq
        %v323 = vshrl.u32 %v322, 7
        %v324 = vsub.s32 0, %v323
        %v325 = vrot.slane %v320, %v324
        %v331 = vunpack.c.l.b16 %v316
        %v332 = vunpack.c.l.b16 %v317
        %v333 = vunpack.c.l.b16 %v318
        %v334 = vunpack.c.l.b16 %v319
        %v335 = vpack.c.b16 %v332, %v331
        %v336 = vpack.c.b16 %v334, %v333
        %vm337 = vcmask 261120
        %v339 = vsel %vm337, %v315, 0
        %v342 = vsel %vm337, %v335, 0
        %v345 = vsel %vm337, %v336, 0
        %347 = vmatprep.subr.bf16.mxu0 0
        %348 = vmatpush1.bf16.xpose.msra.mxu0 %v342
        %349 = vmatprep.subr.bf16.mxu0 0
        %350 = vmatpush1.bf16.xpose.msra.mxu0 %v345
        %351 = vmatprep.subr.bf16.mxu0 0
        %352 = vmatpush1.bf16.xpose.msra.mxu0 0
        %353 = vmatprep.subr.bf16.mxu0 0
        %354 = vmatpush1.bf16.xpose.msra.mxu0 0
        %355 = vmatprep.subr.bf16.mxu0 0
        %356 = vmatpush1.bf16.xpose.msra.mxu0 0
        %357 = vmatprep.subr.bf16.mxu0 0
        %358 = vmatpush1.bf16.xpose.msra.mxu0 0
        %359 = vmatprep.subr.bf16.mxu0 0
        %360 = vmatpush1.bf16.xpose.msra.mxu0 0
        %361 = vmatprep.subr.bf16.mxu0 0
        %362 = vmatpush1.bf16.xpose.msra.mxu0 0
        %363 = vmatprep.subr.bf16.mxu0 0
        %364 = vmatpush1.bf16.xpose.msra.mxu0 0
        %365 = vmatprep.subr.bf16.mxu0 0
        %366 = vmatpush1.bf16.xpose.msra.mxu0 0
        %367 = vmatprep.subr.bf16.mxu0 0
        %368 = vmatpush1.bf16.xpose.msra.mxu0 0
        %369 = vmatprep.subr.bf16.mxu0 0
        %370 = vmatpush1.bf16.xpose.msra.mxu0 0
        %371 = vmatprep.subr.bf16.mxu0 0
        %372 = vmatpush1.bf16.xpose.msra.mxu0 0
        %373 = vmatprep.subr.bf16.mxu0 0
        %374 = vmatpush1.bf16.xpose.msra.mxu0 0
        %375 = vmatprep.subr.bf16.mxu0 0
        %376 = vmatpush1.bf16.xpose.msra.mxu0 0
        %377 = vmatprep.subr.bf16.mxu0 0
        %378 = vmatpush1.bf16.xpose.msra.mxu0 0
        %379 = vmatprep.mubr.bf16.mxu0 0
        %380 = vmatmul.mubr.bf16.gmra.mrb[0].mxu0 %v339
        %v381 = vpop.f32.mrb[0].mxu0
        %v382 = vadd.f32 %v325, %v381
        %v383 = vpop.f32.mrb[0].mxu0
        %v384 = vpop.f32.mrb[0].mxu0
        %v385 = vadd.f32 %v325, %v384
        %v386 = vpop.f32.mrb[0].mxu0
        %387 = vdwg.mxu0
        %p388 = scmp.eq.s32.totalorder %s28, 0
        // Predicated region
        $region45: #{tpu_custom_call.1} parent=31 // pred_check
          %p389 = pneg %p388
        $region46: #{tpu_custom_call.1} parent=31 // pred_check_branch
          %391 = sbr.rel (%p389) target = $region48
        $region47: #{tpu_custom_call.1} parent=31 // pred_region
          %v392 = vpack.c.bf16 %v385, %v382
          %v394 = vunpack.c.l.b16 %v392
          %v395 = vunpack.c.h.b16 %v392
          %v396 = vpack.c.b16 %v394, %v394
          %v397 = vpack.c.b16 %v395, %v395
          %vm400 = vcmask 257024
          %401 = vst.msk [vmem:[#allocation8] sm:$0xf] %vm400, %v396
          %402 = vst.msk [vmem:[#allocation8 + $0x4] sm:$0xf] %vm400, %v397
        $region48: #{tpu_custom_call.1} parent=31 // pred_fallthru
          _
        %p403 = scmp.eq.s32.totalorder %s28, 1
        // Predicated region
        $region49: #{tpu_custom_call.1} parent=31 // pred_check
          %p404 = pneg %p403
        $region50: #{tpu_custom_call.1} parent=31 // pred_check_branch
          %406 = sbr.rel (%p404) target = $region52
        $region51: #{tpu_custom_call.1} parent=31 // pred_region
          %v407 = vpack.c.bf16 %v385, %v382
          %v409 = vunpack.c.l.b16 %v407
          %v410 = vunpack.c.h.b16 %v407
          %v411 = vpack.c.b16 %v409, %v409
          %v412 = vpack.c.b16 %v410, %v410
          %vm415 = vcmask 257024
          %416 = vst.msk [vmem:[#allocation9] sm:$0xf] %vm415, %v411
          %417 = vst.msk [vmem:[#allocation9 + $0x4] sm:$0xf] %vm415, %v412
        $region52: #{tpu_custom_call.1} parent=31 // pred_fallthru
          _
        %p418 = scmp.eq.s32.totalorder %s28, 2
        // Predicated region
        $region53: #{tpu_custom_call.1} parent=31 // pred_check
          %p419 = pneg %p418
        $region54: #{tpu_custom_call.1} parent=31 // pred_check_branch
          %421 = sbr.rel (%p419) target = $region56
        $region55: #{tpu_custom_call.1} parent=31 // pred_region
          %v422 = vpack.c.bf16 %v385, %v382
          %v424 = vunpack.c.l.b16 %v422
          %v425 = vunpack.c.h.b16 %v422
          %v426 = vpack.c.b16 %v424, %v424
          %v427 = vpack.c.b16 %v425, %v425
          %vm430 = vcmask 257024
          %431 = vst.msk [vmem:[#allocation11] sm:$0xf] %vm430, %v426
          %432 = vst.msk [vmem:[#allocation11 + $0x4] sm:$0xf] %vm430, %v427
        $region56: #{tpu_custom_call.1} parent=31 // pred_fallthru
          _
        // Predicated region
        $region57: #{tpu_custom_call.1} parent=31 // pred_check
          %p433 = pneg %p131
        $region58: #{tpu_custom_call.1} parent=31 // pred_check_branch
          %435 = sbr.rel (%p433) target = $region60
        $region59: #{tpu_custom_call.1} parent=31 // pred_region
          %s436 = smul.u32 2, %s27
          %s438 = ssub.s32 128, 128
          %439 = vsyncadd [#allocation4], %s438
          %s440 = smul.addr %s436, 64
          %s441 = scalar_lea.hbm %s3, %s440
          %s442 = sshll.u32 [#allocation8], 4
          %s443 = int_to_ptr.vmem [resolvable:$true] %s442
          %448 = dma.vmem_to_hbm [thread:$0]  %s443, 128, %s441, [#allocation4], 64, 64, 4
        $region60: #{tpu_custom_call.1} parent=31 // pred_fallthru
          _
        // Predicated region
        $region61: #{tpu_custom_call.1} parent=31 // pred_check
          %p449 = pneg %p157
        $region62: #{tpu_custom_call.1} parent=31 // pred_check_branch
          %451 = sbr.rel (%p449) target = $region64
        $region63: #{tpu_custom_call.1} parent=31 // pred_region
          %s452 = smul.u32 2, %s27
          %s454 = ssub.s32 128, 128
          %455 = vsyncadd [#allocation10], %s454
          %s456 = smul.addr %s452, 64
          %s457 = scalar_lea.hbm %s4, %s456
          %s458 = sshll.u32 [#allocation9], 4
          %s459 = int_to_ptr.vmem [resolvable:$true] %s458
          %464 = dma.vmem_to_hbm [thread:$0]  %s459, 128, %s457, [#allocation10], 64, 64, 4
        $region64: #{tpu_custom_call.1} parent=31 // pred_fallthru
          _
        // Predicated region
        $region65: #{tpu_custom_call.1} parent=31 // pred_check
          %p465 = pneg %p183
        $region66: #{tpu_custom_call.1} parent=31 // pred_check_branch
          %467 = sbr.rel (%p465) target = $region68
        $region67: #{tpu_custom_call.1} parent=31 // pred_region
          %s468 = smul.u32 2, %s27
          %s470 = ssub.s32 128, 128
          %471 = vsyncadd [#allocation10], %s470
          %s472 = smul.addr %s468, 64
          %s473 = scalar_lea.hbm %s5, %s472
          %s474 = sshll.u32 [#allocation11], 4
          %s475 = int_to_ptr.vmem [resolvable:$true] %s474
          %480 = dma.vmem_to_hbm [thread:$0]  %s475, 128, %s473, [#allocation10], 64, 64, 4
        $region68: #{tpu_custom_call.1} parent=31 // pred_fallthru
          _
        // Predicated region
        $region69: #{tpu_custom_call.1} parent=31 // pred_check
          %p481 = pneg %p131
        $region70: #{tpu_custom_call.1} parent=31 // pred_check_branch
          %483 = sbr.rel (%p481) target = $region72
        $region71: #{tpu_custom_call.1} parent=31 // pred_region
          %484 = dma.done [#allocation4], 128
        $region72: #{tpu_custom_call.1} parent=31 // pred_fallthru
          _
        // Predicated region
        $region73: #{tpu_custom_call.1} parent=31 // pred_check
          %p485 = pneg %p157
        $region74: #{tpu_custom_call.1} parent=31 // pred_check_branch
          %487 = sbr.rel (%p485) target = $region76
        $region75: #{tpu_custom_call.1} parent=31 // pred_region
          %488 = dma.done [#allocation10], 128
        $region76: #{tpu_custom_call.1} parent=31 // pred_fallthru
          _
        // Predicated region
        $region77: #{tpu_custom_call.1} parent=31 // pred_check
          %p489 = pneg %p183
        $region78: #{tpu_custom_call.1} parent=31 // pred_check_branch
          %491 = sbr.rel (%p489) target = $region80
        $region79: #{tpu_custom_call.1} parent=31 // pred_region
          %492 = dma.done [#allocation10], 128
        $region80: #{tpu_custom_call.1} parent=31 // pred_fallthru
          _
      $region32: #{tpu_custom_call.1} parent=5 // pred_fallthru
        _
      %p493 = scmp.le.s32.totalorder 2, %s18
      // Predicated region
      $region81: #{tpu_custom_call.1} parent=5 // pred_check
        %p494 = pneg %p493
      $region82: #{tpu_custom_call.1} parent=5 // pred_check_branch
        %496 = sbr.rel (%p494) target = $region84
      $region83: #{tpu_custom_call.1} parent=5 // pred_region
        %s497 = ssub.s32 %s18, 2
      $region84: #{tpu_custom_call.1} parent=5 // pred_fallthru
        _
    $region6: #{tpu_custom_call.1} parent=1 // loop_footer
      %s22 = sadd.s32 1, %s18
    $region7: #{tpu_custom_call.1} parent=1 // loop_footer_branch
      %17 = sbr.rel target = $region3
    $region8: #{tpu_custom_call.1} parent=1 // loop_exit
      _
    %498 = vsyncpa [#allocation3], 1
    %s499 = scalar_lea.sflag [#allocation3], 1
    %500 = vsyncpa %s499, 1
    %501 = vsyncpa [#allocation6], 1
    %s502 = scalar_lea.sflag [#allocation6], 1
    %503 = vsyncpa %s502, 1
    %504 = vsyncpa [#allocation4], 1
    %s505 = scalar_lea.sflag [#allocation4], 1
    %506 = vsyncpa %s505, 1
    %507 = vsyncpa [#allocation10], 1

</llo_original>
